<compile_context>
chip_gen: v5e
topology: v5e:2x2
jax: 0.10.0
libtpu: 0.0.40
codegen_flags: <defaults>
</compile_context>

<pallas_src>
import jax
import jax.numpy as jnp
from jax import lax
from jax.experimental import pallas as pl
from jax.experimental.pallas import tpu as pltpu


def mlp_kernel(x_ref, w_ref, b_ref, o_ref):
    # x: (B, K), w: (N, K) -> contract K (dim 1 of both) -> (B, N), f32 acc on MXU.
    z = lax.dot_general(
        x_ref[...], w_ref[...],
        dimension_numbers=(((1,), (1,)), ((), ())),
        preferred_element_type=jnp.float32,
    )
    z = z + b_ref[...]                                   # (1, N) broadcast over (B, N)
    o_ref[...] = jax.nn.sigmoid(z).astype(o_ref.dtype)   # exp on the EUP, f32 epilogue


def mlp_forward(x, w, b2d):
    """x: (B, K) f32, w: (N, K) f32 (PyTorch nn.Linear layout), b2d: (1, N) f32 -> (B, N) f32."""
    B, K = x.shape
    N, K2 = w.shape
    assert K == K2 and b2d.shape == (1, N)

    flops = 2 * B * K * N
    bytes_accessed = 4 * (x.size + w.size + b2d.size + B * N)

    return pl.pallas_call(
        mlp_kernel,
        out_shape=jax.ShapeDtypeStruct((B, N), jnp.float32),
        # Whole problem (~100 KiB) lives in VMEM; no grid, no pipelining.
        in_specs=[
            pl.BlockSpec(memory_space=pltpu.MemorySpace.VMEM),  # x (full array)
            pl.BlockSpec(memory_space=pltpu.MemorySpace.VMEM),  # weight (full array, (N, K))
            pl.BlockSpec(memory_space=pltpu.MemorySpace.VMEM),  # bias (1, N)
        ],
        out_specs=pl.BlockSpec(memory_space=pltpu.MemorySpace.VMEM),
        cost_estimate=pl.CostEstimate(
            flops=flops,
            transcendentals=B * N,          # one exp per output element (sigmoid)
            bytes_accessed=bytes_accessed,
        ),
    )(x, w, b2d)


if __name__ == "__main__":
    input_size = 1024
    num_classes = 16
    batch = 8

    key = jax.random.PRNGKey(0)
    kx, kw, kb = jax.random.split(key, 3)

    # PyTorch nn.Linear(input_size, num_classes): weight (N, K), bias (N,).
    w = jax.random.normal(kw, (num_classes, input_size), jnp.float32) * 0.02
    b = jax.random.normal(kb, (num_classes,), jnp.float32) * 0.02
    b2d = b.reshape(1, num_classes)          # kernel-ready layout, done once at init

    x = jax.random.normal(kx, (batch, input_size), jnp.float32)

    out = jax.block_until_ready(mlp_forward(x, w, b2d))

    # Reference check in plain JAX (y = sigmoid(x @ W^T + b), as in nn.Linear + Sigmoid).
    ref = jax.nn.sigmoid(x @ w.T + b)
    assert out.shape == (batch, num_classes)
    assert jnp.allclose(out, ref, atol=1e-5, rtol=1e-5)

    print("KERNEL_OK")
</pallas_src>

<mosaic_0001>
module attributes {stable_mosaic.version = 11 : i64} {
  func.func @mlp_kernel(%arg0: memref<8x1024xf32, #tpu.memory_space<vmem>>, %arg1: memref<16x1024xf32, #tpu.memory_space<vmem>>, %arg2: memref<1x16xf32, #tpu.memory_space<vmem>>, %arg3: memref<8x16xf32, #tpu.memory_space<vmem>>) attributes {dimension_semantics = [], scalar_prefetch = 0 : i64, scratch_operands = 0 : i64, tpu.core_type = #tpu.core_type<tc>} {
    %c0 = arith.constant 0 : index
    %c0_0 = arith.constant 0 : index
    %0 = vector.load %arg0[%c0, %c0_0] : memref<8x1024xf32, #tpu.memory_space<vmem>>, vector<8x1024xf32>
    %c0_1 = arith.constant 0 : index
    %c0_2 = arith.constant 0 : index
    %1 = vector.load %arg1[%c0_1, %c0_2] : memref<16x1024xf32, #tpu.memory_space<vmem>>, vector<16x1024xf32>
    %cst = arith.constant dense<0.000000e+00> : vector<8x16xf32>
    %2 = tpu.matmul %0, %1, %cst {dimension_numbers = #tpu.dot_dimension_numbers<[1], [1], [0], [0], [0, 0, 1, 0], [], []>} : vector<8x1024xf32>, vector<16x1024xf32>, vector<8x16xf32> -> vector<8x16xf32>
    %c0_3 = arith.constant 0 : index
    %c0_4 = arith.constant 0 : index
    %3 = vector.load %arg2[%c0_3, %c0_4] : memref<1x16xf32, #tpu.memory_space<vmem>>, vector<1x16xf32>
    %4 = vector.broadcast %3 : vector<1x16xf32> to vector<8x16xf32>
    %5 = arith.addf %2, %4 : vector<8x16xf32>
    %6 = arith.negf %5 : vector<8x16xf32>
    %7 = math.exp %6 : vector<8x16xf32>
    %cst_5 = arith.constant 1.000000e+00 : f32
    %8 = vector.broadcast %cst_5 : f32 to vector<8x16xf32>
    %9 = arith.addf %8, %7 : vector<8x16xf32>
    %10 = arith.divf %8, %9 : vector<8x16xf32>
    %c0_6 = arith.constant 0 : index
    %c0_7 = arith.constant 0 : index
    %11 = vector.load %arg3[%c0_6, %c0_7] : memref<8x16xf32, #tpu.memory_space<vmem>>, vector<8x16xf32>
    tpu.vector_store %arg3[%c0_6, %c0_7], %10 {strides = array<i32>} : memref<8x16xf32, #tpu.memory_space<vmem>>, vector<8x16xf32>,
    return
  }
}

</mosaic_0001>

<llo_original>
// kernel: tpu_custom_call.1
$region0: #{tpu_custom_call.1}
  #allocation0 [shape = 'u32[]', space=smem, size = 0x4, offset = 0x4, fixed_abs, tag = 'smem constant byte address 0x4 - core index']
  #allocation1 [shape = 'u32[72,128]{1,0:T(1,128)}', space=vmem, size = 0x9000, scoped, tag = 'internal scratch']
  %s0 = inlined_call_operand.hbm [shape: f32[8,1024], index: 0, kind: input, shape index: {}]
  %s1 = inlined_call_operand.hbm [shape: f32[16,1024], index: 1, kind: input, shape index: {}]
  %s2 = inlined_call_operand.vmem [shape: f32[1,16], index: 2, kind: input, shape index: {}]
  %s3 = inlined_call_operand.hbm [shape: f32[8,16], index: 3, kind: output, shape index: {}]
  %s4 = sld [smem:[#allocation0]]
  $region30: #{tpu_custom_call.1} parent=0
    _
  %s6 = ssub.s32 1, %s4
  %s7 = scalar_select 0, %s6, %s4
  $region1: #{tpu_custom_call.1} parent=0
    #allocation2 [shape = 'u8[32768]{0}', space=vmem, size = 0x8000, scoped, tag = 'input window, operand 0, single buffered']
    #allocation3 [shape = 's32[1]{0}', space=sflag, size = 0x4, scoped, tag = 'scoped memory for tpu_custom_call.1']
    #allocation4 [shape = 's32[1]{0}', space=sflag, size = 0x4, scoped, tag = 'scoped memory for tpu_custom_call.1']
    #allocation5 [shape = 'u8[65536]{0}', space=vmem, size = 0x10000, scoped, tag = 'input window, operand 1, single buffered']
    #allocation6 [shape = 's32[1]{0}', space=sflag, size = 0x4, scoped, tag = 'scoped memory for tpu_custom_call.1']
    #allocation7 [shape = 'u8[4096]{0}', space=vmem, size = 0x1000, scoped, tag = 'output window, operand 0, single buffered']
    %8 = vsyncpa [#allocation3], 0
    %9 = vsyncpa [#allocation6], 0
    %10 = vsyncpa [#allocation4], 0
    // Predicated region
    $region2: #{tpu_custom_call.1} parent=1 // pred_check
      _
    $region3: #{tpu_custom_call.1} parent=1 // pred_check_branch
      %12 = sbr.rel (0) target = $region5
    $region4: #{tpu_custom_call.1} parent=1 // pred_region
      %14 = vsyncadd [#allocation3], 0
      %s16 = sshll.u32 %s0, 4
      %s17 = int_to_ptr.hbm [resolvable:$true] %s16
      %s18 = sshll.u32 [#allocation2], 4
      %s19 = int_to_ptr.vmem [resolvable:$true] %s18
      %21 = dma.hbm_to_vmem [thread:$0]  %s17, 1024, %s19, [#allocation3]
    $region5: #{tpu_custom_call.1} parent=1 // pred_fallthru
      _
    // Predicated region
    $region6: #{tpu_custom_call.1} parent=1 // pred_check
      _
    $region7: #{tpu_custom_call.1} parent=1 // pred_check_branch
      %23 = sbr.rel (0) target = $region9
    $region8: #{tpu_custom_call.1} parent=1 // pred_region
      %25 = vsyncadd [#allocation6], 0
      %s26 = sshll.u32 %s1, 4
      %s27 = int_to_ptr.hbm [resolvable:$true] %s26
      %s28 = sshll.u32 [#allocation5], 4
      %s29 = int_to_ptr.vmem [resolvable:$true] %s28
      %34 = dma.hbm_to_vmem [thread:$0]  %s27, 2048, %s29, [#allocation6], 1024, 1024, 64
    $region9: #{tpu_custom_call.1} parent=1 // pred_fallthru
      _
    // Predicated region
    $region10: #{tpu_custom_call.1} parent=1 // pred_check
      _
    $region11: #{tpu_custom_call.1} parent=1 // pred_check_branch
      %36 = sbr.rel (0) target = $region13
    $region12: #{tpu_custom_call.1} parent=1 // pred_region
      _
    $region13: #{tpu_custom_call.1} parent=1 // pred_fallthru
      _
    // Predicated region
    $region14: #{tpu_custom_call.1} parent=1 // pred_check
      _
    $region15: #{tpu_custom_call.1} parent=1 // pred_check_branch
      %38 = sbr.rel (0) target = $region17
    $region16: #{tpu_custom_call.1} parent=1 // pred_region
      %40 = dma.done [#allocation3], 1024
    $region17: #{tpu_custom_call.1} parent=1 // pred_fallthru
      _
    // Predicated region
    $region18: #{tpu_custom_call.1} parent=1 // pred_check
      _
    $region19: #{tpu_custom_call.1} parent=1 // pred_check_branch
      %42 = sbr.rel (0) target = $region21
    $region20: #{tpu_custom_call.1} parent=1 // pred_region
      %44 = dma.done [#allocation6], 2048
    $region21: #{tpu_custom_call.1} parent=1 // pred_fallthru
      _
    %v45 = vld [vmem:[#allocation2] sm:$0xff]
    %v46 = vld [vmem:[#allocation2 + $0x8] sm:$0xff]
    %v47 = vld [vmem:[#allocation2 + $0x10] sm:$0xff]
    %v48 = vld [vmem:[#allocation2 + $0x18] sm:$0xff]
    %v49 = vld [vmem:[#allocation2 + $0x20] sm:$0xff]
    %v50 = vld [vmem:[#allocation2 + $0x28] sm:$0xff]
    %v51 = vld [vmem:[#allocation2 + $0x30] sm:$0xff]
    %v52 = vld [vmem:[#allocation2 + $0x38] sm:$0xff]
    %v53 = vld [vmem:[#allocation5] sm:$0xff]
    %v54 = vld [vmem:[#allocation5 + $0x8] sm:$0xff]
    %v55 = vld [vmem:[#allocation5 + $0x10] sm:$0xff]
    %v56 = vld [vmem:[#allocation5 + $0x18] sm:$0xff]
    %v57 = vld [vmem:[#allocation5 + $0x20] sm:$0xff]
    %v58 = vld [vmem:[#allocation5 + $0x28] sm:$0xff]
    %v59 = vld [vmem:[#allocation5 + $0x30] sm:$0xff]
    %v60 = vld [vmem:[#allocation5 + $0x38] sm:$0xff]
    %v61 = vld [vmem:[#allocation5 + $0x40] sm:$0xff]
    %v62 = vld [vmem:[#allocation5 + $0x48] sm:$0xff]
    %v63 = vld [vmem:[#allocation5 + $0x50] sm:$0xff]
    %v64 = vld [vmem:[#allocation5 + $0x58] sm:$0xff]
    %v65 = vld [vmem:[#allocation5 + $0x60] sm:$0xff]
    %v66 = vld [vmem:[#allocation5 + $0x68] sm:$0xff]
    %v67 = vld [vmem:[#allocation5 + $0x70] sm:$0xff]
    %v68 = vld [vmem:[#allocation5 + $0x78] sm:$0xff]
    %v69 = vld [vmem:[%s2] sm:$0x1]
    %v71 = vperm.slane %v69, 0
    %73 = vmatpush.xpose.msra.mxu0 0.0
    %74 = vmatpush.xpose.msra.mxu0 0.0
    %75 = vmatpush.xpose.msra.mxu0 0.0
    %76 = vmatpush.xpose.msra.mxu0 0.0
    %77 = vmatpush.xpose.msra.mxu0 0.0
    %78 = vmatpush.xpose.msra.mxu0 0.0
    %79 = vmatpush.xpose.msra.mxu0 0.0
    %80 = vmatpush.xpose.msra.mxu0 0.0
    %81 = vmatpush.xpose.msra.mxu0 0.0
    %82 = vmatpush.xpose.msra.mxu0 0.0
    %83 = vmatpush.xpose.msra.mxu0 0.0
    %84 = vmatpush.xpose.msra.mxu0 0.0
    %85 = vmatpush.xpose.msra.mxu0 0.0
    %86 = vmatpush.xpose.msra.mxu0 0.0
    %87 = vmatpush.xpose.msra.mxu0 %v61
    %88 = vmatpush.xpose.msra.mxu0 %v53
    %89 = vmatmul.f32.gmra.mxu0 %v45
    %v90 = vpop.f32.mrf.mxu0
    %v91 = vadd.f32 %v71, %v90
    %92 = vdwg.mxu0
    %93 = vmatpush.xpose.msra.mxu0 0.0
    %94 = vmatpush.xpose.msra.mxu0 0.0
    %95 = vmatpush.xpose.msra.mxu0 0.0
    %96 = vmatpush.xpose.msra.mxu0 0.0
    %97 = vmatpush.xpose.msra.mxu0 0.0
    %98 = vmatpush.xpose.msra.mxu0 0.0
    %99 = vmatpush.xpose.msra.mxu0 0.0
    %100 = vmatpush.xpose.msra.mxu0 0.0
    %101 = vmatpush.xpose.msra.mxu0 0.0
    %102 = vmatpush.xpose.msra.mxu0 0.0
    %103 = vmatpush.xpose.msra.mxu0 0.0
    %104 = vmatpush.xpose.msra.mxu0 0.0
    %105 = vmatpush.xpose.msra.mxu0 0.0
    %106 = vmatpush.xpose.msra.mxu0 0.0
    %107 = vmatpush.xpose.msra.mxu0 %v62
    %108 = vmatpush.xpose.msra.mxu0 %v54
    %109 = vmatmul.f32.gmra.mxu0 %v46
    %v110 = vpop.f32.mrf.mxu0
    %v111 = vadd.f32 %v91, %v110
    %112 = vdwg.mxu0
    %113 = vmatpush.xpose.msra.mxu0 0.0
    %114 = vmatpush.xpose.msra.mxu0 0.0
    %115 = vmatpush.xpose.msra.mxu0 0.0
    %116 = vmatpush.xpose.msra.mxu0 0.0
    %117 = vmatpush.xpose.msra.mxu0 0.0
    %118 = vmatpush.xpose.msra.mxu0 0.0
    %119 = vmatpush.xpose.msra.mxu0 0.0
    %120 = vmatpush.xpose.msra.mxu0 0.0
    %121 = vmatpush.xpose.msra.mxu0 0.0
    %122 = vmatpush.xpose.msra.mxu0 0.0
    %123 = vmatpush.xpose.msra.mxu0 0.0
    %124 = vmatpush.xpose.msra.mxu0 0.0
    %125 = vmatpush.xpose.msra.mxu0 0.0
    %126 = vmatpush.xpose.msra.mxu0 0.0
    %127 = vmatpush.xpose.msra.mxu0 %v63
    %128 = vmatpush.xpose.msra.mxu0 %v55
    %129 = vmatmul.f32.gmra.mxu0 %v47
    %v130 = vpop.f32.mrf.mxu0
    %v131 = vadd.f32 %v111, %v130
    %132 = vdwg.mxu0
    %133 = vmatpush.xpose.msra.mxu0 0.0
    %134 = vmatpush.xpose.msra.mxu0 0.0
    %135 = vmatpush.xpose.msra.mxu0 0.0
    %136 = vmatpush.xpose.msra.mxu0 0.0
    %137 = vmatpush.xpose.msra.mxu0 0.0
    %138 = vmatpush.xpose.msra.mxu0 0.0
    %139 = vmatpush.xpose.msra.mxu0 0.0
    %140 = vmatpush.xpose.msra.mxu0 0.0
    %141 = vmatpush.xpose.msra.mxu0 0.0
    %142 = vmatpush.xpose.msra.mxu0 0.0
    %143 = vmatpush.xpose.msra.mxu0 0.0
    %144 = vmatpush.xpose.msra.mxu0 0.0
    %145 = vmatpush.xpose.msra.mxu0 0.0
    %146 = vmatpush.xpose.msra.mxu0 0.0
    %147 = vmatpush.xpose.msra.mxu0 %v64
    %148 = vmatpush.xpose.msra.mxu0 %v56
    %149 = vmatmul.f32.gmra.mxu0 %v48
    %v150 = vpop.f32.mrf.mxu0
    %v151 = vadd.f32 %v131, %v150
    %152 = vdwg.mxu0
    %153 = vmatpush.xpose.msra.mxu0 0.0
    %154 = vmatpush.xpose.msra.mxu0 0.0
    %155 = vmatpush.xpose.msra.mxu0 0.0
    %156 = vmatpush.xpose.msra.mxu0 0.0
    %157 = vmatpush.xpose.msra.mxu0 0.0
    %158 = vmatpush.xpose.msra.mxu0 0.0
    %159 = vmatpush.xpose.msra.mxu0 0.0
    %160 = vmatpush.xpose.msra.mxu0 0.0
    %161 = vmatpush.xpose.msra.mxu0 0.0
    %162 = vmatpush.xpose.msra.mxu0 0.0
    %163 = vmatpush.xpose.msra.mxu0 0.0
    %164 = vmatpush.xpose.msra.mxu0 0.0
    %165 = vmatpush.xpose.msra.mxu0 0.0
    %166 = vmatpush.xpose.msra.mxu0 0.0
    %167 = vmatpush.xpose.msra.mxu0 %v65
    %168 = vmatpush.xpose.msra.mxu0 %v57
    %169 = vmatmul.f32.gmra.mxu0 %v49
    %v170 = vpop.f32.mrf.mxu0
    %v171 = vadd.f32 %v151, %v170
    %172 = vdwg.mxu0
    %173 = vmatpush.xpose.msra.mxu0 0.0
    %174 = vmatpush.xpose.msra.mxu0 0.0
    %175 = vmatpush.xpose.msra.mxu0 0.0
    %176 = vmatpush.xpose.msra.mxu0 0.0
    %177 = vmatpush.xpose.msra.mxu0 0.0
    %178 = vmatpush.xpose.msra.mxu0 0.0
    %179 = vmatpush.xpose.msra.mxu0 0.0
    %180 = vmatpush.xpose.msra.mxu0 0.0
    %181 = vmatpush.xpose.msra.mxu0 0.0
    %182 = vmatpush.xpose.msra.mxu0 0.0
    %183 = vmatpush.xpose.msra.mxu0 0.0
    %184 = vmatpush.xpose.msra.mxu0 0.0
    %185 = vmatpush.xpose.msra.mxu0 0.0
    %186 = vmatpush.xpose.msra.mxu0 0.0
    %187 = vmatpush.xpose.msra.mxu0 %v66
    %188 = vmatpush.xpose.msra.mxu0 %v58
    %189 = vmatmul.f32.gmra.mxu0 %v50
    %v190 = vpop.f32.mrf.mxu0
    %v191 = vadd.f32 %v171, %v190
    %192 = vdwg.mxu0
    %193 = vmatpush.xpose.msra.mxu0 0.0
    %194 = vmatpush.xpose.msra.mxu0 0.0
    %195 = vmatpush.xpose.msra.mxu0 0.0
    %196 = vmatpush.xpose.msra.mxu0 0.0
    %197 = vmatpush.xpose.msra.mxu0 0.0
    %198 = vmatpush.xpose.msra.mxu0 0.0
    %199 = vmatpush.xpose.msra.mxu0 0.0
    %200 = vmatpush.xpose.msra.mxu0 0.0
    %201 = vmatpush.xpose.msra.mxu0 0.0
    %202 = vmatpush.xpose.msra.mxu0 0.0
    %203 = vmatpush.xpose.msra.mxu0 0.0
    %204 = vmatpush.xpose.msra.mxu0 0.0
    %205 = vmatpush.xpose.msra.mxu0 0.0
    %206 = vmatpush.xpose.msra.mxu0 0.0
    %207 = vmatpush.xpose.msra.mxu0 %v67
    %208 = vmatpush.xpose.msra.mxu0 %v59
    %209 = vmatmul.f32.gmra.mxu0 %v51
    %v210 = vpop.f32.mrf.mxu0
    %v211 = vadd.f32 %v191, %v210
    %212 = vdwg.mxu0
    %213 = vmatpush.xpose.msra.mxu0 0.0
    %214 = vmatpush.xpose.msra.mxu0 0.0
    %215 = vmatpush.xpose.msra.mxu0 0.0
    %216 = vmatpush.xpose.msra.mxu0 0.0
    %217 = vmatpush.xpose.msra.mxu0 0.0
    %218 = vmatpush.xpose.msra.mxu0 0.0
    %219 = vmatpush.xpose.msra.mxu0 0.0
    %220 = vmatpush.xpose.msra.mxu0 0.0
    %221 = vmatpush.xpose.msra.mxu0 0.0
    %222 = vmatpush.xpose.msra.mxu0 0.0
    %223 = vmatpush.xpose.msra.mxu0 0.0
    %224 = vmatpush.xpose.msra.mxu0 0.0
    %225 = vmatpush.xpose.msra.mxu0 0.0
    %226 = vmatpush.xpose.msra.mxu0 0.0
    %227 = vmatpush.xpose.msra.mxu0 %v68
    %228 = vmatpush.xpose.msra.mxu0 %v60
    %229 = vmatmul.f32.gmra.mxu0 %v52
    %v230 = vpop.f32.mrf.mxu0
    %v231 = vadd.f32 %v211, %v230
    %232 = vdwg.mxu0
    %v233 = vxor.u32 %v231, 2147483648
    %v234 = vmul.f32 %v233, 1.442695
    %v235 = vpow.pop %v234
    %v236 = vadd.f32 %v235, 1.0
    %v237 = vrcp.pop %v236
    %v238 = vmul.f32 %v236, %v237
    %v239 = vsub.f32 1.0, %v238
    %v240 = vmul.f32 %v237, %v239
    %v241 = vadd.f32 %v237, %v240
    %vm242 = vweird.f32 %v236
    %vm243 = vweird.f32 %v237
    %vm244 = vmor %vm242, %vm243
    %v245 = vsel %vm244, %v237, %v241
    %v246 = vand.u32 2147483647, %v236
    %vm247 = vcmp.eq.f32.partialorder %v246, 8.507059e+37
    %v248 = vand.u32 %v236, 2147483648
    %v249 = vor.u32 1.1754944e-38, %v248
    %v250 = vsel %vm247, %v249, %v245
    %v251 = vmul.f32 1.0, %v250
    %vm252 = vcmask 130048
    %253 = vst.msk [vmem:[#allocation7] sm:$0xff] %vm252, %v251
    // Predicated region
    $region22: #{tpu_custom_call.1} parent=1 // pred_check
      _
    $region23: #{tpu_custom_call.1} parent=1 // pred_check_branch
      %255 = sbr.rel (0) target = $region25
    $region24: #{tpu_custom_call.1} parent=1 // pred_region
      %257 = vsyncadd [#allocation4], 0
      %s259 = sshll.u32 [#allocation7], 4
      %s260 = int_to_ptr.vmem [resolvable:$true] %s259
      %s261 = sshll.u32 %s3, 4
      %s262 = int_to_ptr.hbm [resolvable:$true] %s261
      %264 = dma.vmem_to_hbm [thread:$0]  %s260, 128, %s262, [#allocation4]
    $region25: #{tpu_custom_call.1} parent=1 // pred_fallthru
      _
    // Predicated region
    $region26: #{tpu_custom_call.1} parent=1 // pred_check
      _
    $region27: #{tpu_custom_call.1} parent=1 // pred_check_branch
      %266 = sbr.rel (0) target = $region29
    $region28: #{tpu_custom_call.1} parent=1 // pred_region
      %268 = dma.done [#allocation4], 128
    $region29: #{tpu_custom_call.1} parent=1 // pred_fallthru
      _
    %269 = vsyncpa [#allocation3], 1
    %270 = vsyncpa [#allocation6], 1
    %271 = vsyncpa [#allocation4], 1

</llo_original>
